<compile_context>
chip_gen: v7x
topology: tpu7x:2x2x1
jax: 0.10.0
libtpu: 0.0.40
codegen_flags: <defaults>
</compile_context>

<pallas_src>
import functools

import jax
import jax.numpy as jnp
from jax.experimental import pallas as pl
from jax.experimental.pallas import tpu as pltpu


def _round_up(x: int, m: int) -> int:
    return (x + m - 1) // m * m


def make_bayes_linear_lrt_kernel(matmul_dtype):
    def kernel(x_ref, w_mu_t_ref, w_std2_t_ref, w_eps_ref, b_out_ref,
               out_ref, acc_mu_ref, acc_var_ref):
        k = pl.program_id(2)

        @pl.when(k == 0)
        def _init():
            acc_mu_ref[...] = jnp.zeros_like(acc_mu_ref)
            acc_var_ref[...] = jnp.zeros_like(acc_var_ref)

        x = x_ref[...]                                   # (tm, tk) f32
        x2 = x * x                                       # square in f32 (VPU), then cast
        xm = x.astype(matmul_dtype)
        x2m = x2.astype(matmul_dtype)
        w_mu_t = w_mu_t_ref[...].astype(matmul_dtype)    # (tk, tn)
        w_std2_t = w_std2_t_ref[...].astype(matmul_dtype)

        # act_mu  += x   @ w_mu.T                 (MXU, f32 accumulate)
        # act_var += x^2 @ softplus(w_rho).T ^ 2  (MXU, f32 accumulate)
        acc_mu_ref[...] += jnp.dot(xm, w_mu_t, preferred_element_type=jnp.float32)
        acc_var_ref[...] += jnp.dot(x2m, w_std2_t, preferred_element_type=jnp.float32)

        @pl.when(k == pl.num_programs(2) - 1)
        def _finalize():
            act_std = jnp.sqrt(jnp.maximum(acc_var_ref[...], 0.0))   # cheap insurance
            out_ref[...] = (acc_mu_ref[...]
                            + act_std * w_eps_ref[...]
                            + b_out_ref[...]).astype(out_ref.dtype)

    return kernel


@functools.partial(jax.jit, static_argnames=("tile_m", "tile_n", "tile_k", "matmul_dtype"))
def bayes_linear_lrt_forward(x, w_mu, w_rho, bias_mu, bias_rho, w_eps, bias_eps,
                             *, tile_m=128, tile_n=256, tile_k=256,
                             matmul_dtype=jnp.float32):
    """x: (B, In); w_mu/w_rho: (Out, In); bias_*: (Out,); w_eps: (B, Out); bias_eps: (Out,)."""
    B, In = x.shape
    Out = w_mu.shape[0]

    # Shrink tiles for small problems while keeping (8, 128) alignment.
    tm = min(tile_m, _round_up(B, 8))
    tn = min(tile_n, _round_up(Out, 128))
    tk = min(tile_k, _round_up(In, 128))

    Bp = _round_up(B, tm)
    Inp = _round_up(In, tk)
    Outp = _round_up(Out, tn)

    # Hoisted weight / bias math (plain JAX, outside the kernel hot loop).
    w_mu_t = jnp.transpose(w_mu)                                    # (In, Out)
    w_std2_t = jnp.transpose(jnp.square(jax.nn.softplus(w_rho)))    # (In, Out)
    b_out = bias_mu + jax.nn.softplus(bias_rho) * bias_eps          # (Out,)

    def pad2(a, rows, cols):
        return jnp.pad(a, ((0, rows - a.shape[0]), (0, cols - a.shape[1])))

    x_p = pad2(x, Bp, Inp)
    w_mu_t_p = pad2(w_mu_t, Inp, Outp)
    w_std2_t_p = pad2(w_std2_t, Inp, Outp)
    w_eps_p = pad2(w_eps, Bp, Outp)
    b_out_p = pad2(b_out.reshape(1, Out), 1, Outp)

    grid = (Bp // tm, Outp // tn, Inp // tk)

    flops = 2 * 2 * Bp * Inp * Outp                       # two matmuls
    bytes_accessed = 4 * (Bp * Inp + 2 * Inp * Outp + 2 * Bp * Outp + Outp)

    out_p = pl.pallas_call(
        make_bayes_linear_lrt_kernel(matmul_dtype),
        out_shape=jax.ShapeDtypeStruct((Bp, Outp), jnp.float32),
        grid=grid,
        in_specs=[
            pl.BlockSpec((tm, tk), lambda i, j, k: (i, k)),   # x
            pl.BlockSpec((tk, tn), lambda i, j, k: (k, j)),   # w_mu^T
            pl.BlockSpec((tk, tn), lambda i, j, k: (k, j)),   # softplus(w_rho)^2 ^T
            pl.BlockSpec((tm, tn), lambda i, j, k: (i, j)),   # w_eps (resident over k)
            pl.BlockSpec((1, tn), lambda i, j, k: (0, j)),    # b_out  (resident over k)
        ],
        out_specs=pl.BlockSpec((tm, tn), lambda i, j, k: (i, j)),
        scratch_shapes=[
            pltpu.VMEM((tm, tn), jnp.float32),   # act_mu accumulator
            pltpu.VMEM((tm, tn), jnp.float32),   # act_var accumulator
        ],
        compiler_params=pltpu.CompilerParams(
            dimension_semantics=("parallel", "parallel", "arbitrary"),
            vmem_limit_bytes=48 * 1024 * 1024,
        ),
        cost_estimate=pl.CostEstimate(
            flops=flops, transcendentals=Bp * Outp, bytes_accessed=bytes_accessed),
    )(x_p, w_mu_t_p, w_std2_t_p, w_eps_p, b_out_p)

    return out_p[:B, :Out]


def compute_kld(mu_prior, std_prior, mu_posterior, std_posterior):
    # Plain-JAX auxiliary (the module stores this on `self`; it is never returned).
    return 0.5 * jnp.sum(
        2.0 * jnp.log(std_prior / std_posterior) - 1.0
        + (std_posterior / std_prior) ** 2
        + ((mu_prior - mu_posterior) / std_prior) ** 2
    )


if __name__ == "__main__":
    B, In, Out = 8, 32, 16
    key = jax.random.PRNGKey(0)
    k_x, k_wmu, k_wrho, k_bmu, k_brho, k_weps, k_beps = jax.random.split(key, 7)

    # Deterministic parameter init matching the module's __init__ distributions.
    x = jax.random.normal(k_x, (B, In), dtype=jnp.float32)
    w_mu = jax.random.uniform(k_wmu, (Out, In), minval=-0.2, maxval=0.2, dtype=jnp.float32)
    w_rho = jax.random.uniform(k_wrho, (Out, In), minval=-5.0, maxval=-4.0, dtype=jnp.float32)
    bias_mu = jax.random.uniform(k_bmu, (Out,), minval=-0.2, maxval=0.2, dtype=jnp.float32)
    bias_rho = jax.random.uniform(k_brho, (Out,), minval=-5.0, maxval=-4.0, dtype=jnp.float32)

    # eps ~ N(0, 1), generated deterministically outside the kernel.
    w_eps = jax.random.normal(k_weps, (B, Out), dtype=jnp.float32)
    bias_eps = jax.random.normal(k_beps, (Out,), dtype=jnp.float32)

    out = bayes_linear_lrt_forward(x, w_mu, w_rho, bias_mu, bias_rho,
                                   w_eps, bias_eps)
    out = jax.block_until_ready(out)

    # Pure-JAX reference check of the forward semantics.
    w_std = jax.nn.softplus(w_rho)
    b_std = jax.nn.softplus(bias_rho)
    act_mu_ref = x @ w_mu.T
    act_std_ref = jnp.sqrt((x ** 2) @ (w_std ** 2).T)
    ref = act_mu_ref + act_std_ref * w_eps + (bias_mu + b_std * bias_eps)[None, :]
    assert out.shape == (B, Out), f"bad output shape {out.shape}"
    assert jnp.allclose(out, ref, atol=1e-4, rtol=1e-4), "mismatch vs reference"

    # Auxiliary KL (the reference forward intends this via the missing `self.kld`).
    kl = compute_kld(0.0, 1.0, w_mu, w_std) + compute_kld(0.0, 0.1, bias_mu, b_std)
    jax.block_until_ready(kl)

    print("KERNEL_OK")
</pallas_src>

<mosaic_0001>
module attributes {stable_mosaic.version = 11 : i64} {
  func.func @kernel(%arg0: i32, %arg1: i32, %arg2: i32, %arg3: memref<8x128xf32, #tpu.memory_space<vmem>>, %arg4: memref<128x128xf32, #tpu.memory_space<vmem>>, %arg5: memref<128x128xf32, #tpu.memory_space<vmem>>, %arg6: memref<8x128xf32, #tpu.memory_space<vmem>>, %arg7: memref<1x128xf32, #tpu.memory_space<vmem>>, %arg8: memref<8x128xf32, #tpu.memory_space<vmem>>, %arg9: memref<8x128xf32, #tpu.memory_space<vmem>>, %arg10: memref<8x128xf32, #tpu.memory_space<vmem>>) attributes {dimension_semantics = [#tpu.dimension_semantics<parallel>, #tpu.dimension_semantics<parallel>, #tpu.dimension_semantics<arbitrary>], iteration_bounds = array<i64: 1, 1, 1>, scalar_prefetch = 0 : i64, scratch_operands = 2 : i64, tpu.core_type = #tpu.core_type<tc>, window_params = [{transform_indices = @transform_0, window_bounds = array<i64: 8, 128>}, {transform_indices = @transform_1, window_bounds = array<i64: 128, 128>}, {transform_indices = @transform_2, window_bounds = array<i64: 128, 128>}, {transform_indices = @transform_3, window_bounds = array<i64: 8, 128>}, {transform_indices = @transform_4, window_bounds = array<i64: 1, 128>}, {transform_indices = @transform_5, window_bounds = array<i64: 8, 128>}]} {
    %c0_i32 = arith.constant 0 : i32
    %0 = arith.cmpi eq, %arg2, %c0_i32 : i32
    %1 = arith.extui %0 : i1 to i32
    %c0_i32_0 = arith.constant 0 : i32
    %2 = arith.cmpi ne, %1, %c0_i32_0 : i32
    scf.if %2 {
      %cst_17 = arith.constant 0.000000e+00 : f32
      %18 = vector.broadcast %cst_17 : f32 to vector<8x128xf32>
      %c0_18 = arith.constant 0 : index
      %c0_19 = arith.constant 0 : index
      %19 = vector.load %arg9[%c0_18, %c0_19] : memref<8x128xf32, #tpu.memory_space<vmem>>, vector<8x128xf32>
      tpu.vector_store %arg9[%c0_18, %c0_19], %18 {strides = array<i32>} : memref<8x128xf32, #tpu.memory_space<vmem>>, vector<8x128xf32>,
      %cst_20 = arith.constant 0.000000e+00 : f32
      %20 = vector.broadcast %cst_20 : f32 to vector<8x128xf32>
      %c0_21 = arith.constant 0 : index
      %c0_22 = arith.constant 0 : index
      %21 = vector.load %arg10[%c0_21, %c0_22] : memref<8x128xf32, #tpu.memory_space<vmem>>, vector<8x128xf32>
      tpu.vector_store %arg10[%c0_21, %c0_22], %20 {strides = array<i32>} : memref<8x128xf32, #tpu.memory_space<vmem>>, vector<8x128xf32>,
    } else {
    }
    %c0 = arith.constant 0 : index
    %c0_1 = arith.constant 0 : index
    %3 = vector.load %arg3[%c0, %c0_1] : memref<8x128xf32, #tpu.memory_space<vmem>>, vector<8x128xf32>
    %4 = arith.mulf %3, %3 : vector<8x128xf32>
    %c0_2 = arith.constant 0 : index
    %c0_3 = arith.constant 0 : index
    %5 = vector.load %arg4[%c0_2, %c0_3] : memref<128x128xf32, #tpu.memory_space<vmem>>, vector<128x128xf32>
    %c0_4 = arith.constant 0 : index
    %c0_5 = arith.constant 0 : index
    %6 = vector.load %arg5[%c0_4, %c0_5] : memref<128x128xf32, #tpu.memory_space<vmem>>, vector<128x128xf32>
    %c0_6 = arith.constant 0 : index
    %c0_7 = arith.constant 0 : index
    %7 = vector.load %arg9[%c0_6, %c0_7] : memref<8x128xf32, #tpu.memory_space<vmem>>, vector<8x128xf32>
    %cst = arith.constant dense<0.000000e+00> : vector<8x128xf32>
    %8 = tpu.matmul %3, %5, %cst {dimension_numbers = #tpu.dot_dimension_numbers<[1], [0], [0], [1], [0, 0, 1, 1], [], []>} : vector<8x128xf32>, vector<128x128xf32>, vector<8x128xf32> -> vector<8x128xf32>
    %9 = arith.addf %7, %8 : vector<8x128xf32>
    %c0_8 = arith.constant 0 : index
    %c0_9 = arith.constant 0 : index
    %10 = vector.load %arg9[%c0_8, %c0_9] : memref<8x128xf32, #tpu.memory_space<vmem>>, vector<8x128xf32>
    tpu.vector_store %arg9[%c0_8, %c0_9], %9 {strides = array<i32>} : memref<8x128xf32, #tpu.memory_space<vmem>>, vector<8x128xf32>,
    %c0_10 = arith.constant 0 : index
    %c0_11 = arith.constant 0 : index
    %11 = vector.load %arg10[%c0_10, %c0_11] : memref<8x128xf32, #tpu.memory_space<vmem>>, vector<8x128xf32>
    %cst_12 = arith.constant dense<0.000000e+00> : vector<8x128xf32>
    %12 = tpu.matmul %4, %6, %cst_12 {dimension_numbers = #tpu.dot_dimension_numbers<[1], [0], [0], [1], [0, 0, 1, 1], [], []>} : vector<8x128xf32>, vector<128x128xf32>, vector<8x128xf32> -> vector<8x128xf32>
    %13 = arith.addf %11, %12 : vector<8x128xf32>
    %c0_13 = arith.constant 0 : index
    %c0_14 = arith.constant 0 : index
    %14 = vector.load %arg10[%c0_13, %c0_14] : memref<8x128xf32, #tpu.memory_space<vmem>>, vector<8x128xf32>
    tpu.vector_store %arg10[%c0_13, %c0_14], %13 {strides = array<i32>} : memref<8x128xf32, #tpu.memory_space<vmem>>, vector<8x128xf32>,
    %c0_i32_15 = arith.constant 0 : i32
    %15 = arith.cmpi eq, %arg2, %c0_i32_15 : i32
    %16 = arith.extui %15 : i1 to i32
    %c0_i32_16 = arith.constant 0 : i32
    %17 = arith.cmpi ne, %16, %c0_i32_16 : i32
    scf.if %17 {
      %c0_17 = arith.constant 0 : index
      %c0_18 = arith.constant 0 : index
      %18 = vector.load %arg10[%c0_17, %c0_18] : memref<8x128xf32, #tpu.memory_space<vmem>>, vector<8x128xf32>
      %cst_19 = arith.constant 0.000000e+00 : f32
      %19 = vector.broadcast %cst_19 : f32 to vector<8x128xf32>
      %20 = arith.maximumf %18, %19 : vector<8x128xf32>
      %21 = math.sqrt %20 : vector<8x128xf32>
      %c0_20 = arith.constant 0 : index
      %c0_21 = arith.constant 0 : index
      %22 = vector.load %arg9[%c0_20, %c0_21] : memref<8x128xf32, #tpu.memory_space<vmem>>, vector<8x128xf32>
      %c0_22 = arith.constant 0 : index
      %c0_23 = arith.constant 0 : index
      %23 = vector.load %arg6[%c0_22, %c0_23] : memref<8x128xf32, #tpu.memory_space<vmem>>, vector<8x128xf32>
      %24 = arith.mulf %21, %23 : vector<8x128xf32>
      %25 = arith.addf %22, %24 : vector<8x128xf32>
      %c0_24 = arith.constant 0 : index
      %c0_25 = arith.constant 0 : index
      %26 = vector.load %arg7[%c0_24, %c0_25] : memref<1x128xf32, #tpu.memory_space<vmem>>, vector<1x128xf32>
      %27 = vector.broadcast %26 : vector<1x128xf32> to vector<8x128xf32>
      %28 = arith.addf %25, %27 : vector<8x128xf32>
      %c0_26 = arith.constant 0 : index
      %c0_27 = arith.constant 0 : index
      %29 = vector.load %arg8[%c0_26, %c0_27] : memref<8x128xf32, #tpu.memory_space<vmem>>, vector<8x128xf32>
      tpu.vector_store %arg8[%c0_26, %c0_27], %28 {strides = array<i32>} : memref<8x128xf32, #tpu.memory_space<vmem>>, vector<8x128xf32>,
    } else {
    }
    return
  }
  func.func @transform_0(%arg0: i32, %arg1: i32, %arg2: i32) -> (i32, i32) {
    %c0_i32 = arith.constant 0 : i32
    return %arg0, %arg2 : i32, i32
  }
  func.func @transform_1(%arg0: i32, %arg1: i32, %arg2: i32) -> (i32, i32) {
    %c0_i32 = arith.constant 0 : i32
    return %arg2, %arg1 : i32, i32
  }
  func.func @transform_2(%arg0: i32, %arg1: i32, %arg2: i32) -> (i32, i32) {
    %c0_i32 = arith.constant 0 : i32
    return %arg2, %arg1 : i32, i32
  }
  func.func @transform_3(%arg0: i32, %arg1: i32, %arg2: i32) -> (i32, i32) {
    %c0_i32 = arith.constant 0 : i32
    return %arg0, %arg1 : i32, i32
  }
  func.func @transform_4(%arg0: i32, %arg1: i32, %arg2: i32) -> (i32, i32) {
    %c0_i32 = arith.constant 0 : i32
    %c0_i32_0 = arith.constant 0 : i32
    return %c0_i32, %arg1 : i32, i32
  }
  func.func @transform_5(%arg0: i32, %arg1: i32, %arg2: i32) -> (i32, i32) {
    %c0_i32 = arith.constant 0 : i32
    return %arg0, %arg1 : i32, i32
  }
}

</mosaic_0001>

<llo_original>
// kernel: bayes_linear_lrt_forward.1
$region0: #{bayes_linear_lrt_forward.1}
  #allocation0 [shape = 'u32[]', space=smem, size = 0x4, offset = 0x4, fixed_abs, tag = 'smem constant byte address 0x4 - core index']
  #allocation1 [shape = 'u32[144,128]{1,0:T(1,128)}', space=vmem, size = 0x12000, scoped, tag = 'internal scratch']
  #allocation2 [shape = 'f32[8,128]{1,0:T(8,128)}', space=vmem, size = 0x1000, scoped, tag = 'scratch operand']
  #allocation3 [shape = 'f32[8,128]{1,0:T(8,128)}', space=vmem, size = 0x1000, scoped, tag = 'scratch operand']
  %s0 = inlined_call_operand.vmem [shape: f32[8,128], index: 0, kind: input, shape index: {}]
  %s1 = inlined_call_operand.vmem [shape: f32[128,128], index: 1, kind: input, shape index: {}]
  %s2 = inlined_call_operand.vmem [shape: f32[128,128], index: 2, kind: input, shape index: {}]
  %s3 = inlined_call_operand.vmem [shape: f32[8,128], index: 3, kind: input, shape index: {}]
  %s4 = inlined_call_operand.vmem [shape: f32[1,128], index: 4, kind: input, shape index: {}]
  %s5 = inlined_call_operand.hbm [shape: f32[8,128], index: 5, kind: output, shape index: {}]
  %s6 = sld [smem:[#allocation0]]
  $region38: #{bayes_linear_lrt_forward.1} parent=0
    _
  %s8 = ssub.s32 1, %s6
  %s9 = scalar_select 0, %s8, %s6
  $region1: #{bayes_linear_lrt_forward.1} parent=0
    #allocation4 [shape = 'u8[4096]{0}', space=vmem, size = 0x1000, scoped, tag = 'output window, operand 0, single buffered']
    #allocation5 [shape = 's32[1]{0}', space=sflag, size = 0x4, scoped, tag = 'scoped memory for bayes_linear_lrt_forward.1']
    %10 = vsyncpa [#allocation5], 0
    // Predicated region
    $region2: #{bayes_linear_lrt_forward.1} parent=1 // pred_check
      _
    $region3: #{bayes_linear_lrt_forward.1} parent=1 // pred_check_branch
      %12 = sbr.rel (0) target = $region5
    $region4: #{bayes_linear_lrt_forward.1} parent=1 // pred_region
      _
    $region5: #{bayes_linear_lrt_forward.1} parent=1 // pred_fallthru
      _
    // Predicated region
    $region6: #{bayes_linear_lrt_forward.1} parent=1 // pred_check
      _
    $region7: #{bayes_linear_lrt_forward.1} parent=1 // pred_check_branch
      %14 = sbr.rel (0) target = $region9
    $region8: #{bayes_linear_lrt_forward.1} parent=1 // pred_region
      _
    $region9: #{bayes_linear_lrt_forward.1} parent=1 // pred_fallthru
      _
    // Predicated region
    $region10: #{bayes_linear_lrt_forward.1} parent=1 // pred_check
      _
    $region11: #{bayes_linear_lrt_forward.1} parent=1 // pred_check_branch
      %16 = sbr.rel (0) target = $region13
    $region12: #{bayes_linear_lrt_forward.1} parent=1 // pred_region
      _
    $region13: #{bayes_linear_lrt_forward.1} parent=1 // pred_fallthru
      _
    // Predicated region
    $region14: #{bayes_linear_lrt_forward.1} parent=1 // pred_check
      _
    $region15: #{bayes_linear_lrt_forward.1} parent=1 // pred_check_branch
      %18 = sbr.rel (0) target = $region17
    $region16: #{bayes_linear_lrt_forward.1} parent=1 // pred_region
      _
    $region17: #{bayes_linear_lrt_forward.1} parent=1 // pred_fallthru
      _
    // Predicated region
    $region18: #{bayes_linear_lrt_forward.1} parent=1 // pred_check
      _
    $region19: #{bayes_linear_lrt_forward.1} parent=1 // pred_check_branch
      %20 = sbr.rel (0) target = $region21
    $region20: #{bayes_linear_lrt_forward.1} parent=1 // pred_region
      _
    $region21: #{bayes_linear_lrt_forward.1} parent=1 // pred_fallthru
      _
    %p21 = scmp.eq.s32.totalorder 0, 0
    // Predicated region
    $region22: #{bayes_linear_lrt_forward.1} parent=1 // pred_check
      %p22 = pneg %p21
    $region23: #{bayes_linear_lrt_forward.1} parent=1 // pred_check_branch
      %24 = sbr.rel (%p22) target = $region25
    $region24: #{bayes_linear_lrt_forward.1} parent=1 // pred_region
      %25 = vst [vmem:[#allocation2] sm:$0xff] 0.0
      %26 = vst [vmem:[#allocation3] sm:$0xff] 0.0
    $region25: #{bayes_linear_lrt_forward.1} parent=1 // pred_fallthru
      _
    %v27 = vld [vmem:[%s0] sm:$0xff]
    %v28 = vmul.f32 %v27, %v27
    %v29 = vld [vmem:[%s1] sm:$0xff]
    %v30 = vld [vmem:[%s1 + $0x8] sm:$0xff]
    %v31 = vld [vmem:[%s1 + $0x10] sm:$0xff]
    %v32 = vld [vmem:[%s1 + $0x18] sm:$0xff]
    %v33 = vld [vmem:[%s1 + $0x20] sm:$0xff]
    %v34 = vld [vmem:[%s1 + $0x28] sm:$0xff]
    %v35 = vld [vmem:[%s1 + $0x30] sm:$0xff]
    %v36 = vld [vmem:[%s1 + $0x38] sm:$0xff]
    %v37 = vld [vmem:[%s1 + $0x40] sm:$0xff]
    %v38 = vld [vmem:[%s1 + $0x48] sm:$0xff]
    %v39 = vld [vmem:[%s1 + $0x50] sm:$0xff]
    %v40 = vld [vmem:[%s1 + $0x58] sm:$0xff]
    %v41 = vld [vmem:[%s1 + $0x60] sm:$0xff]
    %v42 = vld [vmem:[%s1 + $0x68] sm:$0xff]
    %v43 = vld [vmem:[%s1 + $0x70] sm:$0xff]
    %v44 = vld [vmem:[%s1 + $0x78] sm:$0xff]
    %v45 = vld [vmem:[%s2] sm:$0xff]
    %v46 = vld [vmem:[%s2 + $0x8] sm:$0xff]
    %v47 = vld [vmem:[%s2 + $0x10] sm:$0xff]
    %v48 = vld [vmem:[%s2 + $0x18] sm:$0xff]
    %v49 = vld [vmem:[%s2 + $0x20] sm:$0xff]
    %v50 = vld [vmem:[%s2 + $0x28] sm:$0xff]
    %v51 = vld [vmem:[%s2 + $0x30] sm:$0xff]
    %v52 = vld [vmem:[%s2 + $0x38] sm:$0xff]
    %v53 = vld [vmem:[%s2 + $0x40] sm:$0xff]
    %v54 = vld [vmem:[%s2 + $0x48] sm:$0xff]
    %v55 = vld [vmem:[%s2 + $0x50] sm:$0xff]
    %v56 = vld [vmem:[%s2 + $0x58] sm:$0xff]
    %v57 = vld [vmem:[%s2 + $0x60] sm:$0xff]
    %v58 = vld [vmem:[%s2 + $0x68] sm:$0xff]
    %v59 = vld [vmem:[%s2 + $0x70] sm:$0xff]
    %v60 = vld [vmem:[%s2 + $0x78] sm:$0xff]
    %v61 = vld [vmem:[#allocation2] sm:$0xff]
    %62 = vmatprep.subr.mxu0 0.0
    %63 = vmatpush1.msra.mxu0 %v29
    %64 = vmatprep.subr.mxu0 0.0
    %65 = vmatpush1.msra.mxu0 %v30
    %66 = vmatprep.subr.mxu0 0.0
    %67 = vmatpush1.msra.mxu0 %v31
    %68 = vmatprep.subr.mxu0 0.0
    %69 = vmatpush1.msra.mxu0 %v32
    %70 = vmatprep.subr.mxu0 0.0
    %71 = vmatpush1.msra.mxu0 %v33
    %72 = vmatprep.subr.mxu0 0.0
    %73 = vmatpush1.msra.mxu0 %v34
    %74 = vmatprep.subr.mxu0 0.0
    %75 = vmatpush1.msra.mxu0 %v35
    %76 = vmatprep.subr.mxu0 0.0
    %77 = vmatpush1.msra.mxu0 %v36
    %78 = vmatprep.subr.mxu0 0.0
    %79 = vmatpush1.msra.mxu0 %v37
    %80 = vmatprep.subr.mxu0 0.0
    %81 = vmatpush1.msra.mxu0 %v38
    %82 = vmatprep.subr.mxu0 0.0
    %83 = vmatpush1.msra.mxu0 %v39
    %84 = vmatprep.subr.mxu0 0.0
    %85 = vmatpush1.msra.mxu0 %v40
    %86 = vmatprep.subr.mxu0 0.0
    %87 = vmatpush1.msra.mxu0 %v41
    %88 = vmatprep.subr.mxu0 0.0
    %89 = vmatpush1.msra.mxu0 %v42
    %90 = vmatprep.subr.mxu0 0.0
    %91 = vmatpush1.msra.mxu0 %v43
    %92 = vmatprep.subr.mxu0 0.0
    %93 = vmatpush1.msra.mxu0 %v44
    %94 = vmatprep.subr.mxu0 0.0
    %95 = vmatpush1.msra.mxu0 0.0
    %96 = vmatprep.subr.mxu0 0.0
    %97 = vmatpush1.msra.mxu0 0.0
    %98 = vmatprep.subr.mxu0 0.0
    %99 = vmatpush1.msra.mxu0 0.0
    %100 = vmatprep.subr.mxu0 0.0
    %101 = vmatpush1.msra.mxu0 0.0
    %102 = vmatprep.subr.mxu0 0.0
    %103 = vmatpush1.msra.mxu0 0.0
    %104 = vmatprep.subr.mxu0 0.0
    %105 = vmatpush1.msra.mxu0 0.0
    %106 = vmatprep.subr.mxu0 0.0
    %107 = vmatpush1.msra.mxu0 0.0
    %108 = vmatprep.subr.mxu0 0.0
    %109 = vmatpush1.msra.mxu0 0.0
    %110 = vmatprep.subr.mxu0 0.0
    %111 = vmatpush1.msra.mxu0 0.0
    %112 = vmatprep.subr.mxu0 0.0
    %113 = vmatpush1.msra.mxu0 0.0
    %114 = vmatprep.subr.mxu0 0.0
    %115 = vmatpush1.msra.mxu0 0.0
    %116 = vmatprep.subr.mxu0 0.0
    %117 = vmatpush1.msra.mxu0 0.0
    %118 = vmatprep.subr.mxu0 0.0
    %119 = vmatpush1.msra.mxu0 0.0
    %120 = vmatprep.subr.mxu0 0.0
    %121 = vmatpush1.msra.mxu0 0.0
    %122 = vmatprep.subr.mxu0 0.0
    %123 = vmatpush1.msra.mxu0 0.0
    %124 = vmatprep.subr.mxu0 0.0
    %125 = vmatpush1.msra.mxu0 0.0
    %126 = vmatprep.mubr.f32.mxu0 0.0
    %127 = vmatmul.mubr.f32.gmra.mrb[0].mxu0 %v27
    %v128 = vpop.f32.mrb[0].mxu0
    %v129 = vadd.f32 0.0, %v128
    %v130 = vpop.f32.mrb[0].mxu0
    %131 = vdwg.mxu0
    %v132 = vadd.f32 %v61, %v129
    %133 = vst [vmem:[#allocation2] sm:$0xff] %v132
    %v134 = vld [vmem:[#allocation3] sm:$0xff]
    %135 = vmatprep.subr.mxu0 0.0
    %136 = vmatpush1.msra.mxu0 %v45
    %137 = vmatprep.subr.mxu0 0.0
    %138 = vmatpush1.msra.mxu0 %v46
    %139 = vmatprep.subr.mxu0 0.0
    %140 = vmatpush1.msra.mxu0 %v47
    %141 = vmatprep.subr.mxu0 0.0
    %142 = vmatpush1.msra.mxu0 %v48
    %143 = vmatprep.subr.mxu0 0.0
    %144 = vmatpush1.msra.mxu0 %v49
    %145 = vmatprep.subr.mxu0 0.0
    %146 = vmatpush1.msra.mxu0 %v50
    %147 = vmatprep.subr.mxu0 0.0
    %148 = vmatpush1.msra.mxu0 %v51
    %149 = vmatprep.subr.mxu0 0.0
    %150 = vmatpush1.msra.mxu0 %v52
    %151 = vmatprep.subr.mxu0 0.0
    %152 = vmatpush1.msra.mxu0 %v53
    %153 = vmatprep.subr.mxu0 0.0
    %154 = vmatpush1.msra.mxu0 %v54
    %155 = vmatprep.subr.mxu0 0.0
    %156 = vmatpush1.msra.mxu0 %v55
    %157 = vmatprep.subr.mxu0 0.0
    %158 = vmatpush1.msra.mxu0 %v56
    %159 = vmatprep.subr.mxu0 0.0
    %160 = vmatpush1.msra.mxu0 %v57
    %161 = vmatprep.subr.mxu0 0.0
    %162 = vmatpush1.msra.mxu0 %v58
    %163 = vmatprep.subr.mxu0 0.0
    %164 = vmatpush1.msra.mxu0 %v59
    %165 = vmatprep.subr.mxu0 0.0
    %166 = vmatpush1.msra.mxu0 %v60
    %167 = vmatprep.subr.mxu0 0.0
    %168 = vmatpush1.msra.mxu0 0.0
    %169 = vmatprep.subr.mxu0 0.0
    %170 = vmatpush1.msra.mxu0 0.0
    %171 = vmatprep.subr.mxu0 0.0
    %172 = vmatpush1.msra.mxu0 0.0
    %173 = vmatprep.subr.mxu0 0.0
    %174 = vmatpush1.msra.mxu0 0.0
    %175 = vmatprep.subr.mxu0 0.0
    %176 = vmatpush1.msra.mxu0 0.0
    %177 = vmatprep.subr.mxu0 0.0
    %178 = vmatpush1.msra.mxu0 0.0
    %179 = vmatprep.subr.mxu0 0.0
    %180 = vmatpush1.msra.mxu0 0.0
    %181 = vmatprep.subr.mxu0 0.0
    %182 = vmatpush1.msra.mxu0 0.0
    %183 = vmatprep.subr.mxu0 0.0
    %184 = vmatpush1.msra.mxu0 0.0
    %185 = vmatprep.subr.mxu0 0.0
    %186 = vmatpush1.msra.mxu0 0.0
    %187 = vmatprep.subr.mxu0 0.0
    %188 = vmatpush1.msra.mxu0 0.0
    %189 = vmatprep.subr.mxu0 0.0
    %190 = vmatpush1.msra.mxu0 0.0
    %191 = vmatprep.subr.mxu0 0.0
    %192 = vmatpush1.msra.mxu0 0.0
    %193 = vmatprep.subr.mxu0 0.0
    %194 = vmatpush1.msra.mxu0 0.0
    %195 = vmatprep.subr.mxu0 0.0
    %196 = vmatpush1.msra.mxu0 0.0
    %197 = vmatprep.subr.mxu0 0.0
    %198 = vmatpush1.msra.mxu0 0.0
    %199 = vmatprep.mubr.f32.mxu0 0.0
    %200 = vmatmul.mubr.f32.gmra.mrb[0].mxu0 %v28
    %v201 = vpop.f32.mrb[0].mxu0
    %v202 = vadd.f32 0.0, %v201
    %v203 = vpop.f32.mrb[0].mxu0
    %204 = vdwg.mxu0
    %v205 = vadd.f32 %v134, %v202
    %206 = vst [vmem:[#allocation3] sm:$0xff] %v205
    // Predicated region
    $region26: #{bayes_linear_lrt_forward.1} parent=1 // pred_check
      %p207 = pneg %p21
    $region27: #{bayes_linear_lrt_forward.1} parent=1 // pred_check_branch
      %209 = sbr.rel (%p207) target = $region29
    $region28: #{bayes_linear_lrt_forward.1} parent=1 // pred_region
      %v210 = vld [vmem:[#allocation3] sm:$0xff]
      %v211 = vmax.f32 %v210, 0.0
      %v212 = vrsqrt.pop %v211
      %v213 = vmul.f32 %v211, %v212
      %vm214 = vcmp.eq.f32.partialorder %v211, inf
      %v215 = vsel %vm214, %v211, %v213
      %vm216 = vcmp.eq.f32.partialorder %v211, 0.0
      %v217 = vand.u32 %v211, 2147483648
      %v218 = vsel %vm216, %v217, %v215
      %v219 = vld [vmem:[#allocation2] sm:$0xff]
      %v220 = vld [vmem:[%s3] sm:$0xff]
      %v221 = vmul.f32 %v218, %v220
      %v222 = vadd.f32 %v219, %v221
      %v223 = vld [vmem:[%s4] sm:$0x1]
      %v225 = vlaneseq
      %v226 = vshrl.u32 %v225, 7
      %v227 = vsub.s32 0, %v226
      %v228 = vrot.slane %v223, %v227
      %v230 = vadd.f32 %v222, %v228
      %231 = vst [vmem:[#allocation4] sm:$0xff] %v230
    $region29: #{bayes_linear_lrt_forward.1} parent=1 // pred_fallthru
      _
    // Predicated region
    $region30: #{bayes_linear_lrt_forward.1} parent=1 // pred_check
      _
    $region31: #{bayes_linear_lrt_forward.1} parent=1 // pred_check_branch
      %233 = sbr.rel (0) target = $region33
    $region32: #{bayes_linear_lrt_forward.1} parent=1 // pred_region
      %s235 = ssub.s32 128, 128
      %236 = vsyncadd [#allocation5], %s235
      %s238 = sshll.u32 [#allocation4], 4
      %s239 = int_to_ptr.vmem [resolvable:$true] %s238
      %241 = dma.vmem_to_hbm [thread:$0]  %s239, 128, %s5, [#allocation5]
    $region33: #{bayes_linear_lrt_forward.1} parent=1 // pred_fallthru
      _
    // Predicated region
    $region34: #{bayes_linear_lrt_forward.1} parent=1 // pred_check
      _
    $region35: #{bayes_linear_lrt_forward.1} parent=1 // pred_check_branch
      %243 = sbr.rel (0) target = $region37
    $region36: #{bayes_linear_lrt_forward.1} parent=1 // pred_region
      %244 = dma.done [#allocation5], 128
    $region37: #{bayes_linear_lrt_forward.1} parent=1 // pred_fallthru
      _
    %245 = vsyncpa [#allocation5], 1

</llo_original>
